<compile_context>
chip_gen: v7x
topology: tpu7x:2x2x1
jax: 0.10.0
libtpu: 0.0.40
codegen_flags: <defaults>
</compile_context>

<pallas_src>
import jax
import jax.numpy as jnp
from jax import lax
from jax.experimental import pallas as pl
from jax.experimental.pallas import tpu as pltpu

FEATURE_SIZE = 21
C_IN = 14
C_MID = 32
HID = 32
N_OUT = 3
BN_EPS = 1e-5


def vax_kernel(scal_ref, xt_ref, w1_ref, b1_ref, w2_ref, w3b_ref, w4_ref,
               b4_ref, out_ref, gbuf_ref):
    # SMEM scalars: PReLU alphas and folded conv2 bias.
    a1 = scal_ref[0]
    a2 = scal_ref[1]
    a3 = scal_ref[2]
    b2 = scal_ref[3]

    tb = out_ref.shape[1]

    # Bias row of the flattened-feature buffer (Linear(21->32) bias via the
    # ones row).  VMEM scratch persists across grid steps -> write once.
    @pl.when(pl.program_id(0) == 0)
    def _():
        gbuf_ref[FEATURE_SIZE:FEATURE_SIZE + 1, :] = jnp.ones((1, tb),
                                                              jnp.float32)

    w1 = w1_ref[...]                                        # (32, 14) bf16
    # Hoist the lane-broadcasts of the small per-channel columns out of the
    # position loop (JAX does not CSE broadcast_in_dim).
    b1b = jnp.broadcast_to(b1_ref[...], (C_MID, tb))        # (32, TB) f32
    w2b = jnp.broadcast_to(w2_ref[...], (C_MID, tb))        # (32, TB) f32

    def body(l, carry):
        xl = xt_ref[l]                                               # (14, TB) bf16
        h = jnp.dot(w1, xl, preferred_element_type=jnp.float32)      # MXU, f32 acc
        h = h + b1b
        h = jnp.where(h >= 0.0, h, a1 * h)                           # PReLU 1 (f32)
        # 32 -> 1 conv with BN1 folded: VPU multiply + XLU cross-sublane
        # reduce keeps this M=1 stage off the MXU.
        g = jnp.sum(w2b * h, axis=0, keepdims=True) + b2             # (1, TB)
        g = jnp.where(g >= 0.0, g, a2 * g)                           # PReLU 2
        gbuf_ref[pl.ds(l, 1), :] = g                                 # flatten row
        return carry

    lax.fori_loop(0, FEATURE_SIZE, body, 0)

    # Linear(21 -> 32) (+bias via ones row) -> PReLU (BN2 folded downstream).
    z = jnp.dot(w3b_ref[...], gbuf_ref[...].astype(jnp.bfloat16),
                preferred_element_type=jnp.float32)                  # (32, TB)
    z = jnp.where(z >= 0.0, z, a3 * z)                               # PReLU 3

    # Linear(32 -> 3) with BN2 scale folded into the weight, shift into bias.
    o = jnp.dot(w4_ref[...], z.astype(jnp.bfloat16),
                preferred_element_type=jnp.float32) + b4_ref[...]    # (3, TB)
    out_ref[...] = o


def vax_forward(x, kparams, tb_max=8192):
    scal, w1, b1c, w2c, w3b, w4s, b4c = kparams
    B = x.shape[0]

    # Batch tile: multiple of 128 lanes, capped at tb_max, and capped to
    # <= Bpad/2 when Bpad >= 256 so the grid has >= 2 steps (v7x: 2 TCs).
    b128 = max(128, ((B + 127) // 128) * 128)
    tb = max(128, min(tb_max, b128))
    if b128 >= 256 and tb > b128 // 2:
        tb = max(128, (b128 // 2) // 128 * 128)
    bpad = ((B + tb - 1) // tb) * tb

    # Single fused XLA pass: transpose + bf16 cast (+ pad).  No ones-channel
    # concat -> no extra HBM copy of x; conv1 bias is added in-kernel.
    xt = jnp.transpose(x, (2, 1, 0)).astype(jnp.bfloat16)            # (21,14,B)
    if bpad != B:
        xt = jnp.pad(xt, ((0, 0), (0, 0), (0, bpad - B)))

    grid = (bpad // tb,)

    flops = 2 * bpad * (FEATURE_SIZE * (C_MID * C_IN + C_MID)
                        + (FEATURE_SIZE + 1) * HID + HID * N_OUT)
    weight_bytes = (w1.size * 2 + b1c.size * 4 + w2c.size * 4
                    + w3b.size * 2 + w4s.size * 2 + b4c.size * 4 + scal.size * 4)
    bytes_accessed = xt.size * 2 + bpad * N_OUT * 4 + weight_bytes   # weights once

    out = pl.pallas_call(
        vax_kernel,
        out_shape=jax.ShapeDtypeStruct((N_OUT, bpad), jnp.float32),
        grid=grid,
        in_specs=[
            pl.BlockSpec(memory_space=pltpu.MemorySpace.SMEM),        # scal (4,)
            pl.BlockSpec((FEATURE_SIZE, C_IN, tb), lambda i: (0, 0, i)),
            pl.BlockSpec(w1.shape, lambda i: (0, 0)),                 # (32,14) bf16
            pl.BlockSpec(b1c.shape, lambda i: (0, 0)),                # (32,1) f32
            pl.BlockSpec(w2c.shape, lambda i: (0, 0)),                # (32,1) f32
            pl.BlockSpec(w3b.shape, lambda i: (0, 0)),                # (32,22) bf16
            pl.BlockSpec(w4s.shape, lambda i: (0, 0)),                # (3,32) bf16
            pl.BlockSpec(b4c.shape, lambda i: (0, 0)),                # (3,1) f32
        ],
        out_specs=pl.BlockSpec((N_OUT, tb), lambda i: (0, i)),        # lane-dense
        scratch_shapes=[pltpu.VMEM((FEATURE_SIZE + 1, tb), jnp.float32)],
        compiler_params=pltpu.CompilerParams(
            dimension_semantics=("parallel",),
            vmem_limit_bytes=32 * 1024 * 1024),
        cost_estimate=pl.CostEstimate(flops=flops, transcendentals=0,
                                      bytes_accessed=bytes_accessed),
    )(scal, xt, w1, b1c, w2c, w3b, w4s, b4c)

    return out[:, :B].T                                               # (B, 3)


def init_params(key):
    ks = jax.random.split(key, 16)
    p = {}
    p["W1"] = 0.1 * jax.random.normal(ks[0], (C_MID, C_IN), jnp.float32)
    p["b1"] = 0.1 * jax.random.normal(ks[1], (C_MID,), jnp.float32)
    p["a1"], p["a2"], p["a3"] = jnp.float32(0.25), jnp.float32(0.1), jnp.float32(0.2)
    p["g1"] = 1.0 + 0.1 * jax.random.normal(ks[2], (C_MID,), jnp.float32)
    p["be1"] = 0.1 * jax.random.normal(ks[3], (C_MID,), jnp.float32)
    p["rm1"] = 0.1 * jax.random.normal(ks[4], (C_MID,), jnp.float32)
    p["rv1"] = jnp.abs(jax.random.normal(ks[5], (C_MID,), jnp.float32)) + 0.5
    p["W2"] = 0.1 * jax.random.normal(ks[6], (1, C_MID), jnp.float32)
    p["b2"] = jnp.float32(0.05)
    p["W3"] = 0.1 * jax.random.normal(ks[7], (HID, FEATURE_SIZE), jnp.float32)
    p["b3"] = 0.1 * jax.random.normal(ks[8], (HID,), jnp.float32)
    p["g2"] = 1.0 + 0.1 * jax.random.normal(ks[9], (HID,), jnp.float32)
    p["be2"] = 0.1 * jax.random.normal(ks[10], (HID,), jnp.float32)
    p["rm2"] = 0.1 * jax.random.normal(ks[11], (HID,), jnp.float32)
    p["rv2"] = jnp.abs(jax.random.normal(ks[12], (HID,), jnp.float32)) + 0.5
    p["W4"] = 0.1 * jax.random.normal(ks[13], (N_OUT, HID), jnp.float32)
    p["b4"] = 0.1 * jax.random.normal(ks[14], (N_OUT,), jnp.float32)
    return p


def fold_params(p):
    """Plain-JAX glue: fold eval-mode BN into the following linear maps, cast
    MXU operands to bf16, keep VPU-side columns in f32."""
    s1 = p["g1"] / jnp.sqrt(p["rv1"] + BN_EPS)
    t1 = p["be1"] - p["rm1"] * s1
    s2 = p["g2"] / jnp.sqrt(p["rv2"] + BN_EPS)
    t2 = p["be2"] - p["rm2"] * s2

    w1 = p["W1"].astype(jnp.bfloat16)                                # (32, 14)
    b1c = p["b1"][:, None].astype(jnp.float32)                       # (32, 1)
    w2c = (p["W2"] * s1[None, :]).T.astype(jnp.float32)              # (32, 1)
    b2p = p["b2"] + jnp.dot(p["W2"], t1)[0]                          # scalar
    w3b = jnp.concatenate([p["W3"], p["b3"][:, None]],
                          axis=1).astype(jnp.bfloat16)               # (32, 22)
    w4s = (p["W4"] * s2[None, :]).astype(jnp.bfloat16)               # (3, 32)
    b4c = (p["b4"] + jnp.dot(p["W4"], t2))[:, None].astype(jnp.float32)  # (3, 1)

    scal = jnp.stack([p["a1"], p["a2"], p["a3"], b2p]).astype(jnp.float32)
    return (scal, w1, b1c, w2c, w3b, w4s, b4c)


def ref_forward(x, p):
    """Pure-JAX f32 reference mirroring the PyTorch eval-mode forward."""
    prelu = lambda v, a: jnp.where(v >= 0.0, v, a * v)
    h = jnp.einsum("oc,bcl->bol", p["W1"], x) + p["b1"][None, :, None]
    h = prelu(h, p["a1"])
    h = (h - p["rm1"][None, :, None]) / jnp.sqrt(p["rv1"] + BN_EPS)[None, :, None]
    h = h * p["g1"][None, :, None] + p["be1"][None, :, None]
    g = jnp.einsum("oc,bcl->bol", p["W2"], h) + p["b2"]
    g = prelu(g, p["a2"])
    f = g.reshape(x.shape[0], FEATURE_SIZE)
    z = f @ p["W3"].T + p["b3"]
    z = prelu(z, p["a3"])
    z = (z - p["rm2"]) / jnp.sqrt(p["rv2"] + BN_EPS) * p["g2"] + p["be2"]
    return z @ p["W4"].T + p["b4"]


if __name__ == "__main__":
    key = jax.random.PRNGKey(0)
    k_param, k_x = jax.random.split(key)

    B = 8
    x = jax.random.normal(k_x, (B, C_IN, FEATURE_SIZE), jnp.float32)

    p = init_params(k_param)
    kparams = fold_params(p)

    out = jax.block_until_ready(vax_forward(x, kparams))
    ref = jax.block_until_ready(ref_forward(x, p))

    assert out.shape == (B, N_OUT), out.shape
    # bf16 MXU operands -> looser tolerance vs the f32 reference.
    assert jnp.allclose(out, ref, rtol=2e-2, atol=2e-2), (out, ref)
    print("KERNEL_OK")
</pallas_src>

<mosaic_0001>
module attributes {stable_mosaic.version = 11 : i64} {
  func.func @vax_kernel(%arg0: i32, %arg1: memref<4xf32, #tpu.memory_space<smem>>, %arg2: memref<21x14x128xbf16, #tpu.memory_space<vmem>>, %arg3: memref<32x14xbf16, #tpu.memory_space<vmem>>, %arg4: memref<32x1xf32, #tpu.memory_space<vmem>>, %arg5: memref<32x1xf32, #tpu.memory_space<vmem>>, %arg6: memref<32x22xbf16, #tpu.memory_space<vmem>>, %arg7: memref<3x32xbf16, #tpu.memory_space<vmem>>, %arg8: memref<3x1xf32, #tpu.memory_space<vmem>>, %arg9: memref<3x128xf32, #tpu.memory_space<vmem>>, %arg10: memref<22x128xf32, #tpu.memory_space<vmem>>) attributes {dimension_semantics = [#tpu.dimension_semantics<parallel>], iteration_bounds = array<i64: 1>, scalar_prefetch = 0 : i64, scratch_operands = 1 : i64, tpu.core_type = #tpu.core_type<tc>, window_params = [{transform_indices = @transform_0, window_bounds = array<i64: 4>}, {transform_indices = @transform_1, window_bounds = array<i64: 21, 14, 128>}, {pipeline_mode = #tpu.pipeline_mode<synchronous>, transform_indices = @transform_2, window_bounds = array<i64: 32, 14>}, {pipeline_mode = #tpu.pipeline_mode<synchronous>, transform_indices = @transform_3, window_bounds = array<i64: 32, 1>}, {pipeline_mode = #tpu.pipeline_mode<synchronous>, transform_indices = @transform_4, window_bounds = array<i64: 32, 1>}, {pipeline_mode = #tpu.pipeline_mode<synchronous>, transform_indices = @transform_5, window_bounds = array<i64: 32, 22>}, {pipeline_mode = #tpu.pipeline_mode<synchronous>, transform_indices = @transform_6, window_bounds = array<i64: 3, 32>}, {pipeline_mode = #tpu.pipeline_mode<synchronous>, transform_indices = @transform_7, window_bounds = array<i64: 3, 1>}, {transform_indices = @transform_8, window_bounds = array<i64: 3, 128>}]} {
    %c0 = arith.constant 0 : index
    %0 = memref.load %arg1[%c0] : memref<4xf32, #tpu.memory_space<smem>>
    %c1 = arith.constant 1 : index
    %1 = memref.load %arg1[%c1] : memref<4xf32, #tpu.memory_space<smem>>
    %c2 = arith.constant 2 : index
    %2 = memref.load %arg1[%c2] : memref<4xf32, #tpu.memory_space<smem>>
    %c3 = arith.constant 3 : index
    %3 = memref.load %arg1[%c3] : memref<4xf32, #tpu.memory_space<smem>>
    %c0_i32 = arith.constant 0 : i32
    %4 = arith.cmpi eq, %arg0, %c0_i32 : i32
    %5 = arith.extui %4 : i1 to i32
    %c0_i32_0 = arith.constant 0 : i32
    %6 = arith.cmpi ne, %5, %c0_i32_0 : i32
    scf.if %6 {
      %cst_21 = arith.constant 1.000000e+00 : f32
      %31 = vector.broadcast %cst_21 : f32 to vector<1x128xf32>
      %c21 = arith.constant 21 : index
      %c0_22 = arith.constant 0 : index
      %32 = vector.load %arg10[%c21, %c0_22] : memref<22x128xf32, #tpu.memory_space<vmem>>, vector<1x128xf32>
      tpu.vector_store %arg10[%c21, %c0_22], %31 {strides = array<i32>} : memref<22x128xf32, #tpu.memory_space<vmem>>, vector<1x128xf32>,
    } else {
    }
    %c0_1 = arith.constant 0 : index
    %c0_2 = arith.constant 0 : index
    %7 = vector.load %arg3[%c0_1, %c0_2] : memref<32x14xbf16, #tpu.memory_space<vmem>>, vector<32x14xbf16>
    %c0_3 = arith.constant 0 : index
    %c0_4 = arith.constant 0 : index
    %8 = vector.load %arg4[%c0_3, %c0_4] : memref<32x1xf32, #tpu.memory_space<vmem>>, vector<32x1xf32>
    %9 = vector.shape_cast %8 : vector<32x1xf32> to vector<32x1xf32>
    %10 = vector.broadcast %9 : vector<32x1xf32> to vector<32x128xf32>
    %c0_5 = arith.constant 0 : index
    %c0_6 = arith.constant 0 : index
    %11 = vector.load %arg5[%c0_5, %c0_6] : memref<32x1xf32, #tpu.memory_space<vmem>>, vector<32x1xf32>
    %12 = vector.shape_cast %11 : vector<32x1xf32> to vector<32x1xf32>
    %13 = vector.broadcast %12 : vector<32x1xf32> to vector<32x128xf32>
    %c0_i32_7 = arith.constant 0 : i32
    %c21_i32 = arith.constant 21 : i32
    %14 = arith.addi %c0_i32_7, %c21_i32 : i32
    %c1_i32 = arith.constant 1 : i32
    scf.for %arg11 = %c0_i32_7 to %14 step %c1_i32  : i32 {
      %31 = arith.index_cast %arg11 : i32 to index
      %c0_21 = arith.constant 0 : index
      %c0_22 = arith.constant 0 : index
      %32 = vector.load %arg2[%31, %c0_21, %c0_22] : memref<21x14x128xbf16, #tpu.memory_space<vmem>>, vector<1x14x128xbf16>
      %33 = vector.shape_cast %32 : vector<1x14x128xbf16> to vector<14x128xbf16>
      %cst_23 = arith.constant dense<0.000000e+00> : vector<32x128xf32>
      %34 = tpu.matmul %7, %33, %cst_23 {dimension_numbers = #tpu.dot_dimension_numbers<[1], [0], [0], [1], [0, 0, 1, 1], [], []>} : vector<32x14xbf16>, vector<14x128xbf16>, vector<32x128xf32> -> vector<32x128xf32>
      %35 = arith.addf %34, %10 : vector<32x128xf32>
      %cst_24 = arith.constant 0.000000e+00 : f32
      %36 = vector.broadcast %cst_24 : f32 to vector<32x128xf32>
      %37 = arith.cmpf oge, %35, %36 : vector<32x128xf32>
      %38 = vector.broadcast %0 : f32 to vector<32x128xf32>
      %39 = arith.mulf %38, %35 : vector<32x128xf32>
      %40 = arith.select %37, %35, %39 : vector<32x128xi1>, vector<32x128xf32>
      %41 = arith.mulf %13, %40 : vector<32x128xf32>
      %cst_25 = arith.constant dense<0.000000e+00> : vector<128xf32>
      %42 = vector.multi_reduction <add>, %41, %cst_25 [0] : vector<32x128xf32> to vector<128xf32>
      %43 = vector.shape_cast %42 : vector<128xf32> to vector<1x128xf32>
      %44 = vector.broadcast %3 : f32 to vector<1x128xf32>
      %45 = arith.addf %43, %44 : vector<1x128xf32>
      %cst_26 = arith.constant 0.000000e+00 : f32
      %46 = vector.broadcast %cst_26 : f32 to vector<1x128xf32>
      %47 = arith.cmpf oge, %45, %46 : vector<1x128xf32>
      %48 = vector.broadcast %1 : f32 to vector<1x128xf32>
      %49 = arith.mulf %48, %45 : vector<1x128xf32>
      %50 = arith.select %47, %45, %49 : vector<1x128xi1>, vector<1x128xf32>
      %51 = arith.index_cast %arg11 : i32 to index
      %c0_27 = arith.constant 0 : index
      %52 = vector.load %arg10[%51, %c0_27] : memref<22x128xf32, #tpu.memory_space<vmem>>, vector<1x128xf32>
      tpu.vector_store %arg10[%51, %c0_27], %50 {strides = array<i32>} : memref<22x128xf32, #tpu.memory_space<vmem>>, vector<1x128xf32>,
    }
    %c21_i32_8 = arith.constant 21 : i32
    %c0_9 = arith.constant 0 : index
    %c0_10 = arith.constant 0 : index
    %15 = vector.load %arg6[%c0_9, %c0_10] : memref<32x22xbf16, #tpu.memory_space<vmem>>, vector<32x22xbf16>
    %c0_11 = arith.constant 0 : index
    %c0_12 = arith.constant 0 : index
    %16 = vector.load %arg10[%c0_11, %c0_12] : memref<22x128xf32, #tpu.memory_space<vmem>>, vector<22x128xf32>
    %17 = arith.truncf %16 : vector<22x128xf32> to vector<22x128xbf16>
    %cst = arith.constant dense<0.000000e+00> : vector<32x128xf32>
    %18 = tpu.matmul %15, %17, %cst {dimension_numbers = #tpu.dot_dimension_numbers<[1], [0], [0], [1], [0, 0, 1, 1], [], []>} : vector<32x22xbf16>, vector<22x128xbf16>, vector<32x128xf32> -> vector<32x128xf32>
    %cst_13 = arith.constant 0.000000e+00 : f32
    %19 = vector.broadcast %cst_13 : f32 to vector<32x128xf32>
    %20 = arith.cmpf oge, %18, %19 : vector<32x128xf32>
    %21 = vector.broadcast %2 : f32 to vector<32x128xf32>
    %22 = arith.mulf %21, %18 : vector<32x128xf32>
    %23 = arith.select %20, %18, %22 : vector<32x128xi1>, vector<32x128xf32>
    %c0_14 = arith.constant 0 : index
    %c0_15 = arith.constant 0 : index
    %24 = vector.load %arg7[%c0_14, %c0_15] : memref<3x32xbf16, #tpu.memory_space<vmem>>, vector<3x32xbf16>
    %25 = arith.truncf %23 : vector<32x128xf32> to vector<32x128xbf16>
    %cst_16 = arith.constant dense<0.000000e+00> : vector<3x128xf32>
    %26 = tpu.matmul %24, %25, %cst_16 {dimension_numbers = #tpu.dot_dimension_numbers<[1], [0], [0], [1], [0, 0, 1, 1], [], []>} : vector<3x32xbf16>, vector<32x128xbf16>, vector<3x128xf32> -> vector<3x128xf32>
    %c0_17 = arith.constant 0 : index
    %c0_18 = arith.constant 0 : index
    %27 = vector.load %arg8[%c0_17, %c0_18] : memref<3x1xf32, #tpu.memory_space<vmem>>, vector<3x1xf32>
    %28 = vector.broadcast %27 : vector<3x1xf32> to vector<3x128xf32>
    %29 = arith.addf %26, %28 : vector<3x128xf32>
    %c0_19 = arith.constant 0 : index
    %c0_20 = arith.constant 0 : index
    %30 = vector.load %arg9[%c0_19, %c0_20] : memref<3x128xf32, #tpu.memory_space<vmem>>, vector<3x128xf32>
    tpu.vector_store %arg9[%c0_19, %c0_20], %29 {strides = array<i32>} : memref<3x128xf32, #tpu.memory_space<vmem>>, vector<3x128xf32>,
    return
  }
  func.func @transform_0(%arg0: i32) -> i32 {
    %c0_i32 = arith.constant 0 : i32
    %c0_i32_0 = arith.constant 0 : i32
    return %c0_i32 : i32
  }
  func.func @transform_1(%arg0: i32) -> (i32, i32, i32) {
    %c0_i32 = arith.constant 0 : i32
    %c0_i32_0 = arith.constant 0 : i32
    %c0_i32_1 = arith.constant 0 : i32
    return %c0_i32, %c0_i32_0, %arg0 : i32, i32, i32
  }
  func.func @transform_2(%arg0: i32) -> (i32, i32) {
    %c0_i32 = arith.constant 0 : i32
    %c0_i32_0 = arith.constant 0 : i32
    %c0_i32_1 = arith.constant 0 : i32
    return %c0_i32, %c0_i32_0 : i32, i32
  }
  func.func @transform_3(%arg0: i32) -> (i32, i32) {
    %c0_i32 = arith.constant 0 : i32
    %c0_i32_0 = arith.constant 0 : i32
    %c0_i32_1 = arith.constant 0 : i32
    return %c0_i32, %c0_i32_0 : i32, i32
  }
  func.func @transform_4(%arg0: i32) -> (i32, i32) {
    %c0_i32 = arith.constant 0 : i32
    %c0_i32_0 = arith.constant 0 : i32
    %c0_i32_1 = arith.constant 0 : i32
    return %c0_i32, %c0_i32_0 : i32, i32
  }
  func.func @transform_5(%arg0: i32) -> (i32, i32) {
    %c0_i32 = arith.constant 0 : i32
    %c0_i32_0 = arith.constant 0 : i32
    %c0_i32_1 = arith.constant 0 : i32
    return %c0_i32, %c0_i32_0 : i32, i32
  }
  func.func @transform_6(%arg0: i32) -> (i32, i32) {
    %c0_i32 = arith.constant 0 : i32
    %c0_i32_0 = arith.constant 0 : i32
    %c0_i32_1 = arith.constant 0 : i32
    return %c0_i32, %c0_i32_0 : i32, i32
  }
  func.func @transform_7(%arg0: i32) -> (i32, i32) {
    %c0_i32 = arith.constant 0 : i32
    %c0_i32_0 = arith.constant 0 : i32
    %c0_i32_1 = arith.constant 0 : i32
    return %c0_i32, %c0_i32_0 : i32, i32
  }
  func.func @transform_8(%arg0: i32) -> (i32, i32) {
    %c0_i32 = arith.constant 0 : i32
    %c0_i32_0 = arith.constant 0 : i32
    return %c0_i32, %arg0 : i32, i32
  }
}

</mosaic_0001>

<llo_original>
// kernel: tpu_custom_call.1
$region0: #{tpu_custom_call.1}
  #allocation0 [shape = 'u32[]', space=smem, size = 0x4, offset = 0x4, fixed_abs, tag = 'smem constant byte address 0x4 - core index']
  #allocation1 [shape = 'u32[144,128]{1,0:T(1,128)}', space=vmem, size = 0x12000, scoped, tag = 'internal scratch']
  #allocation2 [shape = 'f32[22,128]{1,0:T(8,128)}', space=vmem, size = 0x3000, scoped, tag = 'scratch operand']
  %s0 = inlined_call_operand.vmem [shape: f32[4], index: 0, kind: input, shape index: {}]
  %s1 = inlined_call_operand.hbm [shape: bf16[21,14,128], index: 1, kind: input, shape index: {}]
  %s2 = inlined_call_operand.vmem [shape: bf16[32,14], index: 2, kind: input, shape index: {}]
  %s3 = inlined_call_operand.vmem [shape: f32[32,1], index: 3, kind: input, shape index: {}]
  %s4 = inlined_call_operand.vmem [shape: f32[32,1], index: 4, kind: input, shape index: {}]
  %s5 = inlined_call_operand.vmem [shape: bf16[32,22], index: 5, kind: input, shape index: {}]
  %s6 = inlined_call_operand.vmem [shape: bf16[3,32], index: 6, kind: input, shape index: {}]
  %s7 = inlined_call_operand.vmem [shape: f32[3,1], index: 7, kind: input, shape index: {}]
  %s8 = inlined_call_operand.hbm [shape: f32[3,128], index: 8, kind: output, shape index: {}]
  %s9 = sld [smem:[#allocation0]]
  $region61: #{tpu_custom_call.1} parent=0
    _
  %s11 = ssub.s32 1, %s9
  %s12 = scalar_select 0, %s11, %s9
  $region1: #{tpu_custom_call.1} parent=0
    #allocation3 [shape = 'u8[512]{0}', space=smem, size = 0x200, scoped, tag = 'input window, operand 0, single buffered']
    #allocation4 [shape = 's32[1]{0}', space=sflag, size = 0x4, scoped, tag = 'scoped memory for tpu_custom_call.1']
    #allocation5 [shape = 's32[1]{0}', space=sflag, size = 0x4, scoped, tag = 'scoped memory for tpu_custom_call.1']
    #allocation6 [shape = 's32[1]{0}', space=sflag, size = 0x4, scoped, tag = 'scoped memory for tpu_custom_call.1']
    #allocation7 [shape = 'u8[86016]{0}', space=vmem, size = 0x15000, scoped, tag = 'input window, operand 1, single buffered']
    #allocation8 [shape = 'u8[2048]{0}', space=vmem, size = 0x800, scoped, tag = 'output window, operand 0, single buffered']
    %13 = vsyncpa [#allocation6], 0
    %14 = vsyncpa [#allocation4], 0
    %15 = vsyncpa [#allocation5], 0
    // Predicated region
    $region2: #{tpu_custom_call.1} parent=1 // pred_check
      _
    $region3: #{tpu_custom_call.1} parent=1 // pred_check_branch
      %17 = sbr.rel (0) target = $region5
    $region4: #{tpu_custom_call.1} parent=1 // pred_region
      %s19 = ssub.s32 16, 16
      %20 = vsyncadd [#allocation6], %s19
      %s22 = sshll.u32 %s0, 4
      %s23 = int_to_ptr.vmem [resolvable:$true] %s22
      %25 = dma.vmem_to_smem %s23, 16, [#allocation3], [#allocation6]
    $region5: #{tpu_custom_call.1} parent=1 // pred_fallthru
      _
    // Predicated region
    $region6: #{tpu_custom_call.1} parent=1 // pred_check
      _
    $region7: #{tpu_custom_call.1} parent=1 // pred_check_branch
      %27 = sbr.rel (0) target = $region9
    $region8: #{tpu_custom_call.1} parent=1 // pred_region
      %s29 = ssub.s32 2688, 2688
      %30 = vsyncadd [#allocation4], %s29
      %s31 = sshll.u32 [#allocation7], 4
      %s32 = int_to_ptr.vmem [resolvable:$true] %s31
      %37 = dma.hbm_to_vmem [thread:$0]  %s1, 2688, %s32, [#allocation4], 64, 64, 4
    $region9: #{tpu_custom_call.1} parent=1 // pred_fallthru
      _
    // Predicated region
    $region10: #{tpu_custom_call.1} parent=1 // pred_check
      _
    $region11: #{tpu_custom_call.1} parent=1 // pred_check_branch
      %39 = sbr.rel (0) target = $region13
    $region12: #{tpu_custom_call.1} parent=1 // pred_region
      _
    $region13: #{tpu_custom_call.1} parent=1 // pred_fallthru
      _
    // Predicated region
    $region14: #{tpu_custom_call.1} parent=1 // pred_check
      _
    $region15: #{tpu_custom_call.1} parent=1 // pred_check_branch
      %41 = sbr.rel (0) target = $region17
    $region16: #{tpu_custom_call.1} parent=1 // pred_region
      _
    $region17: #{tpu_custom_call.1} parent=1 // pred_fallthru
      _
    // Predicated region
    $region18: #{tpu_custom_call.1} parent=1 // pred_check
      _
    $region19: #{tpu_custom_call.1} parent=1 // pred_check_branch
      %43 = sbr.rel (0) target = $region21
    $region20: #{tpu_custom_call.1} parent=1 // pred_region
      _
    $region21: #{tpu_custom_call.1} parent=1 // pred_fallthru
      _
    // Predicated region
    $region22: #{tpu_custom_call.1} parent=1 // pred_check
      _
    $region23: #{tpu_custom_call.1} parent=1 // pred_check_branch
      %45 = sbr.rel (0) target = $region25
    $region24: #{tpu_custom_call.1} parent=1 // pred_region
      _
    $region25: #{tpu_custom_call.1} parent=1 // pred_fallthru
      _
    // Predicated region
    $region26: #{tpu_custom_call.1} parent=1 // pred_check
      _
    $region27: #{tpu_custom_call.1} parent=1 // pred_check_branch
      %47 = sbr.rel (0) target = $region29
    $region28: #{tpu_custom_call.1} parent=1 // pred_region
      _
    $region29: #{tpu_custom_call.1} parent=1 // pred_fallthru
      _
    // Predicated region
    $region30: #{tpu_custom_call.1} parent=1 // pred_check
      _
    $region31: #{tpu_custom_call.1} parent=1 // pred_check_branch
      %49 = sbr.rel (0) target = $region33
    $region32: #{tpu_custom_call.1} parent=1 // pred_region
      _
    $region33: #{tpu_custom_call.1} parent=1 // pred_fallthru
      _
    // Predicated region
    $region34: #{tpu_custom_call.1} parent=1 // pred_check
      _
    $region35: #{tpu_custom_call.1} parent=1 // pred_check_branch
      %51 = sbr.rel (0) target = $region37
    $region36: #{tpu_custom_call.1} parent=1 // pred_region
      %52 = dma.done [#allocation6], 16
    $region37: #{tpu_custom_call.1} parent=1 // pred_fallthru
      _
    // Predicated region
    $region38: #{tpu_custom_call.1} parent=1 // pred_check
      _
    $region39: #{tpu_custom_call.1} parent=1 // pred_check_branch
      %54 = sbr.rel (0) target = $region41
    $region40: #{tpu_custom_call.1} parent=1 // pred_region
      %55 = dma.done [#allocation4], 2688
    $region41: #{tpu_custom_call.1} parent=1 // pred_fallthru
      _
    %56 = sfence
    %s58 = sld [smem:[#allocation3]]
    %s59 = sld [smem:[#allocation3 + $0x1]]
    %s60 = sld [smem:[#allocation3 + $0x2]]
    %s61 = sld [smem:[#allocation3 + $0x3]]
    %p62 = scmp.eq.s32.totalorder 0, 0
    // Predicated region
    $region42: #{tpu_custom_call.1} parent=1 // pred_check
      %p63 = pneg %p62
    $region43: #{tpu_custom_call.1} parent=1 // pred_check_branch
      %65 = sbr.rel (%p63) target = $region45
    $region44: #{tpu_custom_call.1} parent=1 // pred_region
      %66 = vst [vmem:[#allocation2 + $0x15] sm:$0x1] 1.0
    $region45: #{tpu_custom_call.1} parent=1 // pred_fallthru
      _
    %v67 = vld [vmem:[%s2] sm:$0xf]
    %v68 = vld [vmem:[%s2 + $0x4] sm:$0xf]
    %v69 = vld [vmem:[%s2 + $0x8] sm:$0xf]
    %v70 = vld [vmem:[%s2 + $0xc] sm:$0xf]
    %v71 = vld [vmem:[%s3] sm:$0xff]
    %v72 = vld [vmem:[%s3 + $0x8] sm:$0xff]
    %v73 = vld [vmem:[%s3 + $0x10] sm:$0xff]
    %v74 = vld [vmem:[%s3 + $0x18] sm:$0xff]
    %76 = vset.pattern.permute.xlu0 0
    %77 = vperm.xlu0 %76, %v71
    %v78 = vpop.permute.xlu0 %77
    %81 = vset.pattern.permute.xlu0 0
    %82 = vperm.xlu0 %81, %v72
    %v83 = vpop.permute.xlu0 %82
    %86 = vset.pattern.permute.xlu0 0
    %87 = vperm.xlu0 %86, %v73
    %v88 = vpop.permute.xlu0 %87
    %91 = vset.pattern.permute.xlu0 0
    %92 = vperm.xlu0 %91, %v74
    %v93 = vpop.permute.xlu0 %92
    %v95 = vld [vmem:[%s4] sm:$0xff]
    %v96 = vld [vmem:[%s4 + $0x8] sm:$0xff]
    %v97 = vld [vmem:[%s4 + $0x10] sm:$0xff]
    %v98 = vld [vmem:[%s4 + $0x18] sm:$0xff]
    %100 = vset.pattern.permute.xlu0 0
    %101 = vperm.xlu0 %100, %v95
    %v102 = vpop.permute.xlu0 %101
    %105 = vset.pattern.permute.xlu0 0
    %106 = vperm.xlu0 %105, %v96
    %v107 = vpop.permute.xlu0 %106
    %110 = vset.pattern.permute.xlu0 0
    %111 = vperm.xlu0 %110, %v97
    %v112 = vpop.permute.xlu0 %111
    %115 = vset.pattern.permute.xlu0 0
    %116 = vperm.xlu0 %115, %v98
    %v117 = vpop.permute.xlu0 %116
    loop: start=0, step=1, limit=21
    $region46: #{tpu_custom_call.1} parent=1 // loop_pre_header
      _
    $region47: #{tpu_custom_call.1} parent=1 // loop_header
      %s120 = sphi 0, %s124
      %p121 = scmp.ge.s32.totalorder %s120, 21
    $region48: #{tpu_custom_call.1} parent=1 // loop_header_branch
      %123 = sbr.rel (%p121) target = $region52
    $region49: #{tpu_custom_call.1} parent=1 // loop_body
      %s125 = smul.u32 %s120, 2
      %s126 = smul.addr %s125, 4
      %s127 = scalar_lea.vmem [#allocation7], %s126
      %v128 = vld [vmem:[%s127] sm:$0xf]
      %v129 = vld [vmem:[%s127 + $0x4] sm:$0x7]
      %v134 = vunpack.c.l.b16 %v67
      %v135 = vunpack.c.l.b16 %v68
      %v136 = vunpack.c.l.b16 %v69
      %v137 = vunpack.c.l.b16 %v70
      %v138 = vpack.c.b16 %v135, %v134
      %v139 = vpack.c.b16 %v137, %v136
      %v142 = vunpack.c.l.b16 %v128
      %v143 = vunpack.c.l.b16 %v129
      %v144 = vpack.c.b16 %v143, %v142
      %vm145 = vcmask 113664
      %v147 = vsel %vm145, %v138, 0
      %v150 = vsel %vm145, %v139, 0
      %vm152 = vcmask 1046528
      %v154 = vsel %vm152, %v144, 0
      %156 = vmatprep.subr.bf16.mxu0 0
      %157 = vmatpush1.bf16.msra.mxu0 %v154
      %158 = vmatprep.subr.bf16.mxu0 0
      %159 = vmatpush1.bf16.msra.mxu0 0
      %160 = vmatprep.subr.bf16.mxu0 0
      %161 = vmatpush1.bf16.msra.mxu0 0
      %162 = vmatprep.subr.bf16.mxu0 0
      %163 = vmatpush1.bf16.msra.mxu0 0
      %164 = vmatprep.subr.bf16.mxu0 0
      %165 = vmatpush1.bf16.msra.mxu0 0
      %166 = vmatprep.subr.bf16.mxu0 0
      %167 = vmatpush1.bf16.msra.mxu0 0
      %168 = vmatprep.subr.bf16.mxu0 0
      %169 = vmatpush1.bf16.msra.mxu0 0
      %170 = vmatprep.subr.bf16.mxu0 0
      %171 = vmatpush1.bf16.msra.mxu0 0
      %172 = vmatprep.subr.bf16.mxu0 0
      %173 = vmatpush1.bf16.msra.mxu0 0
      %174 = vmatprep.subr.bf16.mxu0 0
      %175 = vmatpush1.bf16.msra.mxu0 0
      %176 = vmatprep.subr.bf16.mxu0 0
      %177 = vmatpush1.bf16.msra.mxu0 0
      %178 = vmatprep.subr.bf16.mxu0 0
      %179 = vmatpush1.bf16.msra.mxu0 0
      %180 = vmatprep.subr.bf16.mxu0 0
      %181 = vmatpush1.bf16.msra.mxu0 0
      %182 = vmatprep.subr.bf16.mxu0 0
      %183 = vmatpush1.bf16.msra.mxu0 0
      %184 = vmatprep.subr.bf16.mxu0 0
      %185 = vmatpush1.bf16.msra.mxu0 0
      %186 = vmatprep.subr.bf16.mxu0 0
      %187 = vmatpush1.bf16.msra.mxu0 0
      %188 = vmatprep.mubr.bf16.mxu0 0
      %189 = vmatmul.mubr.bf16.gmra.mrb[0].mxu0 %v147
      %v190 = vpop.f32.mrb[0].mxu0
      %v191 = vadd.f32 %v78, %v190
      %v192 = vpop.f32.mrb[0].mxu0
      %v193 = vpop.f32.mrb[0].mxu0
      %v194 = vadd.f32 %v83, %v193
      %v195 = vpop.f32.mrb[0].mxu0
      %196 = vmatprep.mubr.bf16.mxu0 0
      %197 = vmatmul.mubr.bf16.gmra.mrb[0].mxu0 %v150
      %v198 = vpop.f32.mrb[0].mxu0
      %v199 = vadd.f32 %v88, %v198
      %v200 = vpop.f32.mrb[0].mxu0
      %v201 = vpop.f32.mrb[0].mxu0
      %v202 = vadd.f32 %v93, %v201
      %v203 = vpop.f32.mrb[0].mxu0
      %204 = vdwg.mxu0
      %vm205 = vcmp.ge.f32.partialorder %v191, 0.0
      %vm206 = vcmp.ge.f32.partialorder %v194, 0.0
      %vm207 = vcmp.ge.f32.partialorder %v199, 0.0
      %vm208 = vcmp.ge.f32.partialorder %v202, 0.0
      %v209 = vstv %s58
      %v210 = vmul.f32 %v209, %v191
      %v211 = vmul.f32 %v209, %v194
      %v212 = vmul.f32 %v209, %v199
      %v213 = vmul.f32 %v209, %v202
      %v214 = vsel %vm205, %v191, %v210
      %v215 = vsel %vm206, %v194, %v211
      %v216 = vsel %vm207, %v199, %v212
      %v217 = vsel %vm208, %v202, %v213
      %v218 = vmul.f32 %v102, %v214
      %v219 = vmul.f32 %v107, %v215
      %v220 = vmul.f32 %v112, %v216
      %v221 = vmul.f32 %v117, %v217
      %v222 = vadd.f32 %v218, %v219
      %v223 = vadd.f32 %v222, %v220
      %v224 = vadd.f32 %v223, %v221
      %v225 = vrot.slane %v224, 4
      %v226 = vadd.f32 %v224, %v225
      %v227 = vrot.slane %v226, 2
      %v228 = vadd.f32 %v226, %v227
      %v229 = vrot.slane %v228, 1
      %v230 = vadd.f32 %v228, %v229
      %v231 = vstv %s61
      %v232 = vadd.f32 %v230, %v231
      %vm233 = vcmp.ge.f32.partialorder %v232, 0.0
      %v234 = vstv %s59
      %v235 = vmul.f32 %v234, %v232
      %v236 = vsel %vm233, %v232, %v235
      %s237 = scalar_lea.vmem [#allocation2], %s120
      %238 = vst [vmem:[%s237] sm:$0x1] %v236
    $region50: #{tpu_custom_call.1} parent=1 // loop_footer
      %s124 = sadd.s32 1, %s120
    $region51: #{tpu_custom_call.1} parent=1 // loop_footer_branch
      %119 = sbr.rel target = $region47
    $region52: #{tpu_custom_call.1} parent=1 // loop_exit
      _
    %v239 = vld [vmem:[%s5] sm:$0xf]
    %v240 = vld [vmem:[%s5 + $0x4] sm:$0xf]
    %v241 = vld [vmem:[%s5 + $0x8] sm:$0xf]
    %v242 = vld [vmem:[%s5 + $0xc] sm:$0xf]
    %v243 = vld [vmem:[#allocation2] sm:$0xff]
    %v244 = vld [vmem:[#allocation2 + $0x8] sm:$0xff]
    %v245 = vld [vmem:[#allocation2 + $0x10] sm:$0x3f]
    %v246 = vpack.c.bf16 %v244, %v243
    %v247 = vpack.c.bf16 %v245, %v245
    %v252 = vunpack.c.l.b16 %v239
    %v253 = vunpack.c.l.b16 %v240
    %v254 = vunpack.c.l.b16 %v241
    %v255 = vunpack.c.l.b16 %v242
    %v256 = vpack.c.b16 %v253, %v252
    %v257 = vpack.c.b16 %v255, %v254
    %vm258 = vcmask 179200
    %v260 = vsel %vm258, %v256, 0
    %v263 = vsel %vm258, %v257, 0
    %vm265 = vcmask 1042432
    %v267 = vsel %vm265, %v247, 0
    %269 = vmatprep.subr.bf16.mxu0 0
    %270 = vmatpush1.bf16.msra.mxu0 %v246
    %271 = vmatprep.subr.bf16.mxu0 0
    %272 = vmatpush1.bf16.msra.mxu0 %v267
    %273 = vmatprep.subr.bf16.mxu0 0
    %274 = vmatpush1.bf16.msra.mxu0 0
    %275 = vmatprep.subr.bf16.mxu0 0
    %276 = vmatpush1.bf16.msra.mxu0 0
    %277 = vmatprep.subr.bf16.mxu0 0
    %278 = vmatpush1.bf16.msra.mxu0 0
    %279 = vmatprep.subr.bf16.mxu0 0
    %280 = vmatpush1.bf16.msra.mxu0 0
    %281 = vmatprep.subr.bf16.mxu0 0
    %282 = vmatpush1.bf16.msra.mxu0 0
    %283 = vmatprep.subr.bf16.mxu0 0
    %284 = vmatpush1.bf16.msra.mxu0 0
    %285 = vmatprep.subr.bf16.mxu0 0
    %286 = vmatpush1.bf16.msra.mxu0 0
    %287 = vmatprep.subr.bf16.mxu0 0
    %288 = vmatpush1.bf16.msra.mxu0 0
    %289 = vmatprep.subr.bf16.mxu0 0
    %290 = vmatpush1.bf16.msra.mxu0 0
    %291 = vmatprep.subr.bf16.mxu0 0
    %292 = vmatpush1.bf16.msra.mxu0 0
    %293 = vmatprep.subr.bf16.mxu0 0
    %294 = vmatpush1.bf16.msra.mxu0 0
    %295 = vmatprep.subr.bf16.mxu0 0
    %296 = vmatpush1.bf16.msra.mxu0 0
    %297 = vmatprep.subr.bf16.mxu0 0
    %298 = vmatpush1.bf16.msra.mxu0 0
    %299 = vmatprep.subr.bf16.mxu0 0
    %300 = vmatpush1.bf16.msra.mxu0 0
    %301 = vmatprep.mubr.bf16.mxu0 0
    %302 = vmatmul.mubr.bf16.gmra.mrb[0].mxu0 %v260
    %v303 = vpop.f32.mrb[0].mxu0
    %v304 = vadd.f32 0.0, %v303
    %v305 = vpop.f32.mrb[0].mxu0
    %v306 = vpop.f32.mrb[0].mxu0
    %v307 = vadd.f32 0.0, %v306
    %v308 = vpop.f32.mrb[0].mxu0
    %309 = vmatprep.mubr.bf16.mxu0 0
    %310 = vmatmul.mubr.bf16.gmra.mrb[0].mxu0 %v263
    %v311 = vpop.f32.mrb[0].mxu0
    %v312 = vadd.f32 0.0, %v311
    %v313 = vpop.f32.mrb[0].mxu0
    %v314 = vpop.f32.mrb[0].mxu0
    %v315 = vadd.f32 0.0, %v314
    %v316 = vpop.f32.mrb[0].mxu0
    %317 = vdwg.mxu0
    %vm318 = vcmp.ge.f32.partialorder %v304, 0.0
    %vm319 = vcmp.ge.f32.partialorder %v307, 0.0
    %vm320 = vcmp.ge.f32.partialorder %v312, 0.0
    %vm321 = vcmp.ge.f32.partialorder %v315, 0.0
    %v322 = vstv %s60
    %v323 = vmul.f32 %v322, %v304
    %v324 = vmul.f32 %v322, %v307
    %v325 = vmul.f32 %v322, %v312
    %v326 = vmul.f32 %v322, %v315
    %v327 = vsel %vm318, %v304, %v323
    %v328 = vsel %vm319, %v307, %v324
    %v329 = vsel %vm320, %v312, %v325
    %v330 = vsel %vm321, %v315, %v326
    %v331 = vld [vmem:[%s6] sm:$0x3]
    %v332 = vpack.c.bf16 %v328, %v327
    %v333 = vpack.c.bf16 %v330, %v329
    %v334 = vld [vmem:[%s7] sm:$0x7]
    %336 = vset.pattern.permute.xlu0 0
    %337 = vperm.xlu0 %336, %v334
    %v338 = vpop.permute.xlu0 %337
    %vm340 = vcmask 261120
    %v342 = vsel %vm340, %v331, 0
    %344 = vmatprep.subr.bf16.mxu0 0
    %345 = vmatpush1.bf16.msra.mxu0 %v332
    %346 = vmatprep.subr.bf16.mxu0 0
    %347 = vmatpush1.bf16.msra.mxu0 %v333
    %348 = vmatprep.subr.bf16.mxu0 0
    %349 = vmatpush1.bf16.msra.mxu0 0
    %350 = vmatprep.subr.bf16.mxu0 0
    %351 = vmatpush1.bf16.msra.mxu0 0
    %352 = vmatprep.subr.bf16.mxu0 0
    %353 = vmatpush1.bf16.msra.mxu0 0
    %354 = vmatprep.subr.bf16.mxu0 0
    %355 = vmatpush1.bf16.msra.mxu0 0
    %356 = vmatprep.subr.bf16.mxu0 0
    %357 = vmatpush1.bf16.msra.mxu0 0
    %358 = vmatprep.subr.bf16.mxu0 0
    %359 = vmatpush1.bf16.msra.mxu0 0
    %360 = vmatprep.subr.bf16.mxu0 0
    %361 = vmatpush1.bf16.msra.mxu0 0
    %362 = vmatprep.subr.bf16.mxu0 0
    %363 = vmatpush1.bf16.msra.mxu0 0
    %364 = vmatprep.subr.bf16.mxu0 0
    %365 = vmatpush1.bf16.msra.mxu0 0
    %366 = vmatprep.subr.bf16.mxu0 0
    %367 = vmatpush1.bf16.msra.mxu0 0
    %368 = vmatprep.subr.bf16.mxu0 0
    %369 = vmatpush1.bf16.msra.mxu0 0
    %370 = vmatprep.subr.bf16.mxu0 0
    %371 = vmatpush1.bf16.msra.mxu0 0
    %372 = vmatprep.subr.bf16.mxu0 0
    %373 = vmatpush1.bf16.msra.mxu0 0
    %374 = vmatprep.subr.bf16.mxu0 0
    %375 = vmatpush1.bf16.msra.mxu0 0
    %376 = vmatprep.mubr.bf16.mxu0 0
    %377 = vmatmul.mubr.bf16.gmra.mrb[0].mxu0 %v342
    %v378 = vpop.f32.mrb[0].mxu0
    %v379 = vadd.f32 %v338, %v378
    %v380 = vpop.f32.mrb[0].mxu0
    %v381 = vpop.f32.mrb[0].mxu0
    %v382 = vpop.f32.mrb[0].mxu0
    %383 = vdwg.mxu0
    %384 = vst [vmem:[#allocation8] sm:$0x7] %v379
    // Predicated region
    $region53: #{tpu_custom_call.1} parent=1 // pred_check
      _
    $region54: #{tpu_custom_call.1} parent=1 // pred_check_branch
      %386 = sbr.rel (0) target = $region56
    $region55: #{tpu_custom_call.1} parent=1 // pred_region
      %s388 = ssub.s32 64, 64
      %389 = vsyncadd [#allocation5], %s388
      %s391 = sshll.u32 [#allocation8], 4
      %s392 = int_to_ptr.vmem [resolvable:$true] %s391
      %394 = dma.vmem_to_hbm [thread:$0]  %s392, 64, %s8, [#allocation5]
    $region56: #{tpu_custom_call.1} parent=1 // pred_fallthru
      _
    // Predicated region
    $region57: #{tpu_custom_call.1} parent=1 // pred_check
      _
    $region58: #{tpu_custom_call.1} parent=1 // pred_check_branch
      %396 = sbr.rel (0) target = $region60
    $region59: #{tpu_custom_call.1} parent=1 // pred_region
      %397 = dma.done [#allocation5], 64
    $region60: #{tpu_custom_call.1} parent=1 // pred_fallthru
      _
    %398 = vsyncpa [#allocation4], 1
    %399 = vsyncpa [#allocation5], 1
    %400 = vsyncpa [#allocation6], 1

</llo_original>
